<compile_context>
chip_gen: v6e
topology: v6e:2x2x1
jax: 0.10.0
libtpu: 0.0.40
codegen_flags: <defaults>
</compile_context>

<pallas_src>
import jax
import jax.numpy as jnp
from jax import lax
from jax.experimental import pallas as pl
from jax.experimental.pallas import tpu as pltpu

BN_EPS = 1e-5     # nn.BatchNorm1d default eps
POOL_EPS = 1e-6   # AttentiveStatsPooling eps


def decoder_kernel(enc_ref, w1_ref, wint_ref, woutt_ref, shift2_ref, vec_ref,
                   out_ref):
    """One utterance per grid step; pure 2-D MXU matmuls, f32 vector math.

    enc_ref:    (1, DE, T)  encoder output, native layout (T on lanes), f32
    w1_ref:     (E, T)      Decoder.linear[0] weight, bf16
    wint_ref:   (DE, Hp)    in_linear weight, transposed + lane-padded, bf16
    woutt_ref:  (Hp, DE)    out_linear weight, transposed + lane-padded, bf16
    shift2_ref: (E, DE)     folded Linear bias + BatchNorm1d(E) shift, f32
    vec_ref:    (8, P)      packed per-channel vectors (see wrapper), f32
    out_ref:    (1, 1, 2*DE)
    """
    _, DE, T = enc_ref.shape
    Hp = woutt_ref.shape[0]

    # (DE, T) tile for this utterance; cast to bf16 for the MXU only.
    enc_bf = enc_ref[0].astype(jnp.bfloat16)

    # ---- Decoder.linear[0]: Linear(2*DE, E) along T --------------------------
    # z_pre[e, d] = sum_t w1[e, t] * enc[d, t]   (f32 accumulation)
    z_pre = lax.dot_general(
        w1_ref[...], enc_bf,
        dimension_numbers=(((1,), (1,)), ((), ())),
        preferred_element_type=jnp.float32)                          # (E, DE)

    # ---- Decoder.linear[1]: BatchNorm1d(E), eval mode (channel axis = DE).
    # Linear bias + BN shift folded into shift2 (wrapper).
    s1 = vec_ref[0:1, 0:DE]                                          # (1, DE)
    z = z_pre * s1 + shift2_ref[...]                                 # (E, DE) f32

    # ---- AttentiveStatsPooling ------------------------------------------------
    bin_row = vec_ref[1:2, 0:Hp]                                     # (1, Hp)
    h = jnp.tanh(
        lax.dot_general(z.astype(jnp.bfloat16), wint_ref[...],
                        dimension_numbers=(((1,), (0,)), ((), ())),
                        preferred_element_type=jnp.float32)
        + bin_row)                                                   # (E, Hp)

    # out_linear bias is constant along the softmax (time) axis -> dropped.
    energies = lax.dot_general(
        h.astype(jnp.bfloat16), woutt_ref[...],
        dimension_numbers=(((1,), (0,)), ((), ())),
        preferred_element_type=jnp.float32)                          # (E, DE)

    # softmax over the time axis (axis 0, sublanes); divide on the EUP slot.
    m = jnp.max(energies, axis=0, keepdims=True)                     # (1, DE)
    p = jnp.exp(energies - m)
    denom = jnp.sum(p, axis=0, keepdims=True)
    alphas = p * pl.reciprocal(denom, approx=True)                   # (E, DE)

    az = alphas * z                                                  # reused twice
    means = jnp.sum(az, axis=0, keepdims=True)                       # (1, DE)
    resid = jnp.sum(az * z, axis=0, keepdims=True) - means * means
    stds = jnp.sqrt(jnp.maximum(resid, POOL_EPS))                    # (1, DE)

    # ---- Decoder.pool[1]: BatchNorm1d(2*DE), eval mode; two lane-dense stores.
    out_ref[0:1, 0:1, 0:DE] = (
        means * vec_ref[2:3, 0:DE] + vec_ref[3:4, 0:DE]
    ).reshape(1, 1, DE).astype(out_ref.dtype)
    out_ref[0:1, 0:1, DE:2 * DE] = (
        stds * vec_ref[4:5, 0:DE] + vec_ref[5:6, 0:DE]
    ).reshape(1, 1, DE).astype(out_ref.dtype)


def decoder_forward(enc, params):
    """enc: [B, DE, T] float32  ->  [B, 2*DE] float32 (eval-mode BatchNorm)."""
    B, DE, T = enc.shape
    (w1, b1, g1, be1, rm1, rv1,
     win, bin_, wout, bout,
     g2, be2, rm2, rv2) = params
    E = w1.shape[0]
    H = win.shape[0]

    # Constraints imposed by the PyTorch module itself (fail loudly).
    if T != 2 * DE:
        raise ValueError(f"Decoder requires T == 2*DE (got T={T}, DE={DE})")
    if E != DE:
        raise ValueError(f"Decoder requires E == DE (got E={E}, DE={DE})")

    # ---- parameter glue (tiny; computed once outside the kernel) -------------
    s1 = g1 / jnp.sqrt(rv1 + BN_EPS)                      # (DE,) BN1 scale
    t1 = be1 - rm1 * s1                                   # (DE,) BN1 shift
    # Fold the Linear bias into the BN1 shift: shift2[e, d] = b1[e]*s1[d]+t1[d]
    shift2 = (b1[:, None] * s1[None, :] + t1[None, :]).astype(jnp.float32)
    s2 = g2 / jnp.sqrt(rv2 + BN_EPS)                      # (2*DE,)
    t2 = be2 - rm2 * s2                                   # (2*DE,)

    # Lane-pad the attention hidden size; pre-cast MXU weights to bf16.
    Hp = max(128, ((H + 127) // 128) * 128)
    w1_bf = w1.astype(jnp.bfloat16)                                   # (E, T)
    wint = jnp.zeros((DE, Hp), jnp.bfloat16).at[:, :H].set(
        win.T.astype(jnp.bfloat16))                                   # (DE, Hp)
    woutt = jnp.zeros((Hp, DE), jnp.bfloat16).at[:H, :].set(
        wout.T.astype(jnp.bfloat16))                                  # (Hp, DE)
    # bout is intentionally NOT used: softmax over the time axis is invariant
    # to a per-channel constant shift of the energies.

    # Pack per-channel vectors into one (8, P) slab (single small DMA).
    P = max(DE, Hp)

    def pad_row(v):
        return jnp.zeros((P,), jnp.float32).at[:v.shape[0]].set(
            v.astype(jnp.float32))

    zero_row = jnp.zeros((P,), jnp.float32)
    vec_pack = jnp.stack([
        pad_row(s1),                 # row 0: BN1 scale
        pad_row(bin_),               # row 1: in_linear bias (Hp-padded)
        pad_row(s2[:DE]),            # row 2: BN2 scale (means half)
        pad_row(t2[:DE]),            # row 3: BN2 shift (means half)
        pad_row(s2[DE:]),            # row 4: BN2 scale (stds half)
        pad_row(t2[DE:]),            # row 5: BN2 shift (stds half)
        zero_row, zero_row,          # rows 6-7: padding
    ], axis=0)                       # (8, P)

    def full2(arr):                  # whole small 2-D array, constant block
        return pl.BlockSpec(arr.shape, lambda b: (0, 0))

    out3 = pl.pallas_call(
        decoder_kernel,
        out_shape=jax.ShapeDtypeStruct((B, 1, 2 * DE), jnp.float32),
        grid=(B,),
        in_specs=[
            pl.BlockSpec((1, DE, T), lambda b: (b, 0, 0)),   # enc, native layout
            full2(w1_bf), full2(wint), full2(woutt),
            full2(shift2), full2(vec_pack),
        ],
        out_specs=pl.BlockSpec((1, 1, 2 * DE), lambda b: (b, 0, 0)),
        compiler_params=pltpu.CompilerParams(
            dimension_semantics=("parallel",),        # shard over TCs on v7x
            vmem_limit_bytes=32 * 1024 * 1024),       # safe on v5e/v6e/v7x
    )(enc, w1_bf, wint, woutt, shift2, vec_pack)
    return out3.reshape(B, 2 * DE)


if __name__ == "__main__":
    key = jax.random.PRNGKey(0)
    B, DE, H = 2, 16, 8
    E = DE        # required by BatchNorm1d(E) on a [B, DE, E] tensor
    T = 2 * DE    # required by nn.Linear(2*DE, E) applied along T

    ks = jax.random.split(key, 16)
    enc = jax.random.normal(ks[0], (B, DE, T), jnp.float32)

    # Decoder.linear = [Linear(2*DE, E), BatchNorm1d(E)]
    w1 = 0.1 * jax.random.normal(ks[1], (E, 2 * DE), jnp.float32)
    b1 = 0.1 * jax.random.normal(ks[2], (E,), jnp.float32)
    g1 = 1.0 + 0.1 * jax.random.normal(ks[3], (E,), jnp.float32)
    be1 = 0.1 * jax.random.normal(ks[4], (E,), jnp.float32)
    rm1 = 0.1 * jax.random.normal(ks[5], (E,), jnp.float32)
    rv1 = jax.random.uniform(ks[6], (E,), jnp.float32, minval=0.5, maxval=1.5)

    # AttentiveStatsPooling(DE, H)
    win = 0.1 * jax.random.normal(ks[7], (H, DE), jnp.float32)
    bin_ = 0.1 * jax.random.normal(ks[8], (H,), jnp.float32)
    wout = 0.1 * jax.random.normal(ks[9], (DE, H), jnp.float32)
    bout = 0.1 * jax.random.normal(ks[10], (DE,), jnp.float32)

    # Decoder.pool[1]: BatchNorm1d(2*DE)
    g2 = 1.0 + 0.1 * jax.random.normal(ks[11], (2 * DE,), jnp.float32)
    be2 = 0.1 * jax.random.normal(ks[12], (2 * DE,), jnp.float32)
    rm2 = 0.1 * jax.random.normal(ks[13], (2 * DE,), jnp.float32)
    rv2 = jax.random.uniform(ks[14], (2 * DE,), jnp.float32,
                             minval=0.5, maxval=1.5)

    params = (w1, b1, g1, be1, rm1, rv1, win, bin_, wout, bout,
              g2, be2, rm2, rv2)

    out = jax.block_until_ready(decoder_forward(enc, params))

    # Pure-JAX reference (mirrors the PyTorch forward, eval-mode BatchNorm).
    def reference(enc):
        x1 = jnp.einsum('bdt,et->bde', enc, w1) + b1                    # Linear
        x2 = ((x1 - rm1[None, :, None]) / jnp.sqrt(rv1 + BN_EPS)[None, :, None]
              * g1[None, :, None] + be1[None, :, None])                 # BN1d(E)
        z = jnp.swapaxes(x2, 1, 2)
        h = jnp.tanh(jnp.einsum('btd,hd->bth', z, win) + bin_)
        e = jnp.swapaxes(jnp.einsum('bth,dh->btd', h, wout) + bout, 1, 2)
        a = jax.nn.softmax(e, axis=2)
        means = jnp.sum(a * x2, axis=2)
        resid = jnp.sum(a * x2 ** 2, axis=2) - means ** 2
        stds = jnp.sqrt(jnp.clip(resid, POOL_EPS, None))
        pooled = jnp.concatenate([means, stds], axis=1)
        return (pooled - rm2) / jnp.sqrt(rv2 + BN_EPS) * g2 + be2       # BN1d(2*DE)

    ref = jax.block_until_ready(reference(enc))
    assert out.shape == (B, 2 * DE)
    # bf16 MXU operands + approx reciprocal introduce ~1e-3 relative error.
    assert jnp.allclose(out, ref, atol=2e-2, rtol=2e-2), (
        f"max abs err = {jnp.max(jnp.abs(out - ref))}")
    print("KERNEL_OK")
</pallas_src>

<mosaic_0001>
module attributes {stable_mosaic.version = 11 : i64} {
  func.func @decoder_kernel(%arg0: i32, %arg1: memref<1x16x32xf32, #tpu.memory_space<vmem>>, %arg2: memref<16x32xbf16, #tpu.memory_space<vmem>>, %arg3: memref<16x128xbf16, #tpu.memory_space<vmem>>, %arg4: memref<128x16xbf16, #tpu.memory_space<vmem>>, %arg5: memref<16x16xf32, #tpu.memory_space<vmem>>, %arg6: memref<8x128xf32, #tpu.memory_space<vmem>>, %arg7: memref<1x1x32xf32, #tpu.memory_space<vmem>>) attributes {dimension_semantics = [#tpu.dimension_semantics<parallel>], iteration_bounds = array<i64: 2>, scalar_prefetch = 0 : i64, scratch_operands = 0 : i64, tpu.core_type = #tpu.core_type<tc>, window_params = [{transform_indices = @transform_0, window_bounds = array<i64: 1, 16, 32>}, {pipeline_mode = #tpu.pipeline_mode<synchronous>, transform_indices = @transform_1, window_bounds = array<i64: 16, 32>}, {pipeline_mode = #tpu.pipeline_mode<synchronous>, transform_indices = @transform_2, window_bounds = array<i64: 16, 128>}, {pipeline_mode = #tpu.pipeline_mode<synchronous>, transform_indices = @transform_3, window_bounds = array<i64: 128, 16>}, {pipeline_mode = #tpu.pipeline_mode<synchronous>, transform_indices = @transform_4, window_bounds = array<i64: 16, 16>}, {pipeline_mode = #tpu.pipeline_mode<synchronous>, transform_indices = @transform_5, window_bounds = array<i64: 8, 128>}, {transform_indices = @transform_6, window_bounds = array<i64: 1, 1, 32>}]} {
    %c0 = arith.constant 0 : index
    %c0_0 = arith.constant 0 : index
    %c0_1 = arith.constant 0 : index
    %0 = vector.load %arg1[%c0, %c0_0, %c0_1] : memref<1x16x32xf32, #tpu.memory_space<vmem>>, vector<1x16x32xf32>
    %1 = vector.shape_cast %0 : vector<1x16x32xf32> to vector<16x32xf32>
    %2 = arith.truncf %1 : vector<16x32xf32> to vector<16x32xbf16>
    %c0_2 = arith.constant 0 : index
    %c0_3 = arith.constant 0 : index
    %3 = vector.load %arg2[%c0_2, %c0_3] : memref<16x32xbf16, #tpu.memory_space<vmem>>, vector<16x32xbf16>
    %cst = arith.constant dense<0.000000e+00> : vector<16x16xf32>
    %4 = tpu.matmul %3, %2, %cst {dimension_numbers = #tpu.dot_dimension_numbers<[1], [1], [0], [0], [0, 0, 1, 0], [], []>} : vector<16x32xbf16>, vector<16x32xbf16>, vector<16x16xf32> -> vector<16x16xf32>
    %c0_4 = arith.constant 0 : index
    %c0_5 = arith.constant 0 : index
    %5 = vector.load %arg6[%c0_4, %c0_5] : memref<8x128xf32, #tpu.memory_space<vmem>>, vector<1x16xf32>
    %6 = vector.broadcast %5 : vector<1x16xf32> to vector<16x16xf32>
    %7 = arith.mulf %4, %6 : vector<16x16xf32>
    %c0_6 = arith.constant 0 : index
    %c0_7 = arith.constant 0 : index
    %8 = vector.load %arg5[%c0_6, %c0_7] : memref<16x16xf32, #tpu.memory_space<vmem>>, vector<16x16xf32>
    %9 = arith.addf %7, %8 : vector<16x16xf32>
    %c1 = arith.constant 1 : index
    %c0_8 = arith.constant 0 : index
    %10 = vector.load %arg6[%c1, %c0_8] : memref<8x128xf32, #tpu.memory_space<vmem>>, vector<1x128xf32>
    %11 = arith.truncf %9 : vector<16x16xf32> to vector<16x16xbf16>
    %c0_9 = arith.constant 0 : index
    %c0_10 = arith.constant 0 : index
    %12 = vector.load %arg3[%c0_9, %c0_10] : memref<16x128xbf16, #tpu.memory_space<vmem>>, vector<16x128xbf16>
    %cst_11 = arith.constant dense<0.000000e+00> : vector<16x128xf32>
    %13 = tpu.matmul %11, %12, %cst_11 {dimension_numbers = #tpu.dot_dimension_numbers<[1], [0], [0], [1], [0, 0, 1, 1], [], []>} : vector<16x16xbf16>, vector<16x128xbf16>, vector<16x128xf32> -> vector<16x128xf32>
    %14 = vector.broadcast %10 : vector<1x128xf32> to vector<16x128xf32>
    %15 = arith.addf %13, %14 : vector<16x128xf32>
    %16 = math.tanh %15 : vector<16x128xf32>
    %17 = arith.truncf %16 : vector<16x128xf32> to vector<16x128xbf16>
    %c0_12 = arith.constant 0 : index
    %c0_13 = arith.constant 0 : index
    %18 = vector.load %arg4[%c0_12, %c0_13] : memref<128x16xbf16, #tpu.memory_space<vmem>>, vector<128x16xbf16>
    %cst_14 = arith.constant dense<0.000000e+00> : vector<16x16xf32>
    %19 = tpu.matmul %17, %18, %cst_14 {dimension_numbers = #tpu.dot_dimension_numbers<[1], [0], [0], [1], [0, 0, 1, 1], [], []>} : vector<16x128xbf16>, vector<128x16xbf16>, vector<16x16xf32> -> vector<16x16xf32>
    %cst_15 = arith.constant dense<0xFF800000> : vector<16xf32>
    %20 = vector.multi_reduction <maximumf>, %19, %cst_15 [0] : vector<16x16xf32> to vector<16xf32>
    %21 = vector.shape_cast %20 : vector<16xf32> to vector<1x16xf32>
    %22 = vector.broadcast %21 : vector<1x16xf32> to vector<16x16xf32>
    %23 = arith.subf %19, %22 : vector<16x16xf32>
    %24 = math.exp %23 : vector<16x16xf32>
    %cst_16 = arith.constant dense<0.000000e+00> : vector<16xf32>
    %25 = vector.multi_reduction <add>, %24, %cst_16 [0] : vector<16x16xf32> to vector<16xf32>
    %26 = vector.shape_cast %25 : vector<16xf32> to vector<1x16xf32>
    %27 = tpu.reciprocal %26 {approx = true} : vector<1x16xf32> -> vector<1x16xf32>
    %28 = vector.broadcast %27 : vector<1x16xf32> to vector<16x16xf32>
    %29 = arith.mulf %24, %28 : vector<16x16xf32>
    %30 = arith.mulf %29, %9 : vector<16x16xf32>
    %cst_17 = arith.constant dense<0.000000e+00> : vector<16xf32>
    %31 = vector.multi_reduction <add>, %30, %cst_17 [0] : vector<16x16xf32> to vector<16xf32>
    %32 = vector.shape_cast %31 : vector<16xf32> to vector<1x16xf32>
    %33 = arith.mulf %30, %9 : vector<16x16xf32>
    %cst_18 = arith.constant dense<0.000000e+00> : vector<16xf32>
    %34 = vector.multi_reduction <add>, %33, %cst_18 [0] : vector<16x16xf32> to vector<16xf32>
    %35 = vector.shape_cast %34 : vector<16xf32> to vector<1x16xf32>
    %36 = arith.mulf %32, %32 : vector<1x16xf32>
    %37 = arith.subf %35, %36 : vector<1x16xf32>
    %cst_19 = arith.constant 9.99999997E-7 : f32
    %38 = vector.broadcast %cst_19 : f32 to vector<1x16xf32>
    %39 = arith.maximumf %37, %38 : vector<1x16xf32>
    %40 = math.sqrt %39 : vector<1x16xf32>
    %c2 = arith.constant 2 : index
    %c0_20 = arith.constant 0 : index
    %41 = vector.load %arg6[%c2, %c0_20] : memref<8x128xf32, #tpu.memory_space<vmem>>, vector<1x16xf32>
    %42 = arith.mulf %32, %41 : vector<1x16xf32>
    %c3 = arith.constant 3 : index
    %c0_21 = arith.constant 0 : index
    %43 = vector.load %arg6[%c3, %c0_21] : memref<8x128xf32, #tpu.memory_space<vmem>>, vector<1x16xf32>
    %44 = arith.addf %42, %43 : vector<1x16xf32>
    %45 = vector.shape_cast %44 : vector<1x16xf32> to vector<1x1x16xf32>
    %c0_22 = arith.constant 0 : index
    %c0_23 = arith.constant 0 : index
    %c0_24 = arith.constant 0 : index
    %46 = vector.load %arg7[%c0_22, %c0_23, %c0_24] : memref<1x1x32xf32, #tpu.memory_space<vmem>>, vector<1x1x16xf32>
    tpu.vector_store %arg7[%c0_22, %c0_23, %c0_24], %45 {strides = array<i32>} : memref<1x1x32xf32, #tpu.memory_space<vmem>>, vector<1x1x16xf32>,
    %c4 = arith.constant 4 : index
    %c0_25 = arith.constant 0 : index
    %47 = vector.load %arg6[%c4, %c0_25] : memref<8x128xf32, #tpu.memory_space<vmem>>, vector<1x16xf32>
    %48 = arith.mulf %40, %47 : vector<1x16xf32>
    %c5 = arith.constant 5 : index
    %c0_26 = arith.constant 0 : index
    %49 = vector.load %arg6[%c5, %c0_26] : memref<8x128xf32, #tpu.memory_space<vmem>>, vector<1x16xf32>
    %50 = arith.addf %48, %49 : vector<1x16xf32>
    %51 = vector.shape_cast %50 : vector<1x16xf32> to vector<1x1x16xf32>
    %c0_27 = arith.constant 0 : index
    %c0_28 = arith.constant 0 : index
    %c16 = arith.constant 16 : index
    %52 = vector.load %arg7[%c0_27, %c0_28, %c16] : memref<1x1x32xf32, #tpu.memory_space<vmem>>, vector<1x1x16xf32>
    tpu.vector_store %arg7[%c0_27, %c0_28, %c16], %51 {strides = array<i32>} : memref<1x1x32xf32, #tpu.memory_space<vmem>>, vector<1x1x16xf32>,
    return
  }
  func.func @transform_0(%arg0: i32) -> (i32, i32, i32) {
    %c0_i32 = arith.constant 0 : i32
    %c0_i32_0 = arith.constant 0 : i32
    %c0_i32_1 = arith.constant 0 : i32
    return %arg0, %c0_i32, %c0_i32_0 : i32, i32, i32
  }
  func.func @transform_1(%arg0: i32) -> (i32, i32) {
    %c0_i32 = arith.constant 0 : i32
    %c0_i32_0 = arith.constant 0 : i32
    %c0_i32_1 = arith.constant 0 : i32
    return %c0_i32, %c0_i32_0 : i32, i32
  }
  func.func @transform_2(%arg0: i32) -> (i32, i32) {
    %c0_i32 = arith.constant 0 : i32
    %c0_i32_0 = arith.constant 0 : i32
    %c0_i32_1 = arith.constant 0 : i32
    return %c0_i32, %c0_i32_0 : i32, i32
  }
  func.func @transform_3(%arg0: i32) -> (i32, i32) {
    %c0_i32 = arith.constant 0 : i32
    %c0_i32_0 = arith.constant 0 : i32
    %c0_i32_1 = arith.constant 0 : i32
    return %c0_i32, %c0_i32_0 : i32, i32
  }
  func.func @transform_4(%arg0: i32) -> (i32, i32) {
    %c0_i32 = arith.constant 0 : i32
    %c0_i32_0 = arith.constant 0 : i32
    %c0_i32_1 = arith.constant 0 : i32
    return %c0_i32, %c0_i32_0 : i32, i32
  }
  func.func @transform_5(%arg0: i32) -> (i32, i32) {
    %c0_i32 = arith.constant 0 : i32
    %c0_i32_0 = arith.constant 0 : i32
    %c0_i32_1 = arith.constant 0 : i32
    return %c0_i32, %c0_i32_0 : i32, i32
  }
  func.func @transform_6(%arg0: i32) -> (i32, i32, i32) {
    %c0_i32 = arith.constant 0 : i32
    %c0_i32_0 = arith.constant 0 : i32
    %c0_i32_1 = arith.constant 0 : i32
    return %arg0, %c0_i32, %c0_i32_0 : i32, i32, i32
  }
}

</mosaic_0001>

<llo_original>
// kernel: tpu_custom_call.1
$region0: #{tpu_custom_call.1}
  #allocation0 [shape = 'u32[]', space=smem, size = 0x4, offset = 0x4, fixed_abs, tag = 'smem constant byte address 0x4 - core index']
  #allocation1 [shape = 'u32[144,128]{1,0:T(1,128)}', space=vmem, size = 0x12000, scoped, tag = 'internal scratch']
  %s0 = inlined_call_operand.vmem [shape: f32[2,16,32], index: 0, kind: input, shape index: {}]
  %s1 = inlined_call_operand.vmem [shape: bf16[16,32], index: 1, kind: input, shape index: {}]
  %s2 = inlined_call_operand.vmem [shape: bf16[16,128], index: 2, kind: input, shape index: {}]
  %s3 = inlined_call_operand.vmem [shape: bf16[128,16], index: 3, kind: input, shape index: {}]
  %s4 = inlined_call_operand.vmem [shape: f32[16,16], index: 4, kind: input, shape index: {}]
  %s5 = inlined_call_operand.vmem [shape: f32[8,128], index: 5, kind: input, shape index: {}]
  %s6 = inlined_call_operand.hbm [shape: f32[2,1,32], index: 6, kind: output, shape index: {}]
  %s7 = sld [smem:[#allocation0]]
  $region57: #{tpu_custom_call.1} parent=0
    _
  %s9 = ssub.s32 1, %s7
  %s10 = scalar_select 0, %s9, %s7
  $region1: #{tpu_custom_call.1} parent=0
    #allocation2 [shape = 'u8[1024]{0}', space=vmem, size = 0x400, scoped, tag = 'output window, operand 0']
    #allocation3 [shape = 's32[2]{0}', space=sflag, size = 0x8, scoped, tag = 'scoped memory for tpu_custom_call.1']
    %11 = vsyncpa [#allocation3], 0
    %s12 = scalar_lea.sflag [#allocation3], 1
    %13 = vsyncpa %s12, 0
    loop: start=0, step=1, limit=4
    $region2: #{tpu_custom_call.1} parent=1 // loop_pre_header
      _
    $region3: #{tpu_custom_call.1} parent=1 // loop_header
      %s15 = sphi 0, %s19
      %p16 = scmp.ge.s32.totalorder %s15, 4
      %s25 = sphi 0, %s27
      %s28 = sphi 0, %s25
      %s29 = sphi 0, %s28
      %s45 = sphi 0, %s29
      %s49 = sphi 0, %s49
      %s51 = sphi 0, %s49
      %s52 = sphi 0, %s51
      %s66 = sphi 0, %s52
      %s70 = sphi 0, %s70
      %s72 = sphi 0, %s70
      %s73 = sphi 0, %s72
      %s87 = sphi 0, %s73
      %s91 = sphi 0, %s91
      %s93 = sphi 0, %s91
      %s94 = sphi 0, %s93
      %s108 = sphi 0, %s94
      %s112 = sphi 0, %s112
      %s114 = sphi 0, %s112
      %s115 = sphi 0, %s114
      %s129 = sphi 0, %s115
      %s133 = sphi 0, %s133
      %s135 = sphi 0, %s133
      %s136 = sphi 0, %s135
      %s150 = sphi 0, %s136
      %s156 = sphi 0, %s158
      %s159 = sphi 0, %s156
      %s160 = sphi 0, %s159
      %s176 = sphi 0, %s160
    $region4: #{tpu_custom_call.1} parent=1 // loop_header_branch
      %18 = sbr.rel (%p16) target = $region8
    $region5: #{tpu_custom_call.1} parent=1 // loop_body
      %s20 = ssub.s32 %s15, 1
      %s21 = ssub.s32 %s15, 2
      %s22 = sadd.s32 %s15, 1
      %s23 = ssub.s32 %s15, %s22
      %p24 = scmp.eq.s32.totalorder %s23, 0
      %s26 = sadd.s32 %s25, 1
      %s27 = scalar_select %p24, %s25, %s26
      %p30 = pneg %p24
      %p31 = scmp.eq.s32.totalorder %s15, 1
      %p32 = por %p30, %p31
      %p33 = scmp.ne.s32.totalorder %s25, %s28
      %p34 = scmp.eq.s32.totalorder %s15, 0
      %p35 = por %p33, %p34
      %p36 = scmp.ne.s32.totalorder %s25, %s28
      %p37 = scmp.eq.s32.totalorder %s20, 1
      %p38 = por %p36, %p37
      %p39 = scmp.ne.s32.totalorder %s28, %s29
      %p40 = scmp.eq.s32.totalorder %s20, 0
      %p41 = por %p39, %p40
      %p42 = scmp.ne.s32.totalorder %s28, %s29
      %p43 = scmp.eq.s32.totalorder %s21, 1
      %p44 = por %p42, %p43
      %p46 = scmp.ne.s32.totalorder %s29, %s45
      %p47 = scmp.eq.s32.totalorder %s21, 0
      %p48 = por %p46, %p47
      %s50 = sadd.s32 %s49, 1
      %p53 = scmp.eq.s32.totalorder %s15, 1
      %p54 = scmp.ne.s32.totalorder %s49, %s51
      %p55 = scmp.eq.s32.totalorder %s15, 0
      %p56 = por %p54, %p55
      %p57 = scmp.ne.s32.totalorder %s49, %s51
      %p58 = scmp.eq.s32.totalorder %s20, 1
      %p59 = por %p57, %p58
      %p60 = scmp.ne.s32.totalorder %s51, %s52
      %p61 = scmp.eq.s32.totalorder %s20, 0
      %p62 = por %p60, %p61
      %p63 = scmp.ne.s32.totalorder %s51, %s52
      %p64 = scmp.eq.s32.totalorder %s21, 1
      %p65 = por %p63, %p64
      %p67 = scmp.ne.s32.totalorder %s52, %s66
      %p68 = scmp.eq.s32.totalorder %s21, 0
      %p69 = por %p67, %p68
      %s71 = sadd.s32 %s70, 1
      %p74 = scmp.eq.s32.totalorder %s15, 1
      %p75 = scmp.ne.s32.totalorder %s70, %s72
      %p76 = scmp.eq.s32.totalorder %s15, 0
      %p77 = por %p75, %p76
      %p78 = scmp.ne.s32.totalorder %s70, %s72
      %p79 = scmp.eq.s32.totalorder %s20, 1
      %p80 = por %p78, %p79
      %p81 = scmp.ne.s32.totalorder %s72, %s73
      %p82 = scmp.eq.s32.totalorder %s20, 0
      %p83 = por %p81, %p82
      %p84 = scmp.ne.s32.totalorder %s72, %s73
      %p85 = scmp.eq.s32.totalorder %s21, 1
      %p86 = por %p84, %p85
      %p88 = scmp.ne.s32.totalorder %s73, %s87
      %p89 = scmp.eq.s32.totalorder %s21, 0
      %p90 = por %p88, %p89
      %s92 = sadd.s32 %s91, 1
      %p95 = scmp.eq.s32.totalorder %s15, 1
      %p96 = scmp.ne.s32.totalorder %s91, %s93
      %p97 = scmp.eq.s32.totalorder %s15, 0
      %p98 = por %p96, %p97
      %p99 = scmp.ne.s32.totalorder %s91, %s93
      %p100 = scmp.eq.s32.totalorder %s20, 1
      %p101 = por %p99, %p100
      %p102 = scmp.ne.s32.totalorder %s93, %s94
      %p103 = scmp.eq.s32.totalorder %s20, 0
      %p104 = por %p102, %p103
      %p105 = scmp.ne.s32.totalorder %s93, %s94
      %p106 = scmp.eq.s32.totalorder %s21, 1
      %p107 = por %p105, %p106
      %p109 = scmp.ne.s32.totalorder %s94, %s108
      %p110 = scmp.eq.s32.totalorder %s21, 0
      %p111 = por %p109, %p110
      %s113 = sadd.s32 %s112, 1
      %p116 = scmp.eq.s32.totalorder %s15, 1
      %p117 = scmp.ne.s32.totalorder %s112, %s114
      %p118 = scmp.eq.s32.totalorder %s15, 0
      %p119 = por %p117, %p118
      %p120 = scmp.ne.s32.totalorder %s112, %s114
      %p121 = scmp.eq.s32.totalorder %s20, 1
      %p122 = por %p120, %p121
      %p123 = scmp.ne.s32.totalorder %s114, %s115
      %p124 = scmp.eq.s32.totalorder %s20, 0
      %p125 = por %p123, %p124
      %p126 = scmp.ne.s32.totalorder %s114, %s115
      %p127 = scmp.eq.s32.totalorder %s21, 1
      %p128 = por %p126, %p127
      %p130 = scmp.ne.s32.totalorder %s115, %s129
      %p131 = scmp.eq.s32.totalorder %s21, 0
      %p132 = por %p130, %p131
      %s134 = sadd.s32 %s133, 1
      %p137 = scmp.eq.s32.totalorder %s15, 1
      %p138 = scmp.ne.s32.totalorder %s133, %s135
      %p139 = scmp.eq.s32.totalorder %s15, 0
      %p140 = por %p138, %p139
      %p141 = scmp.ne.s32.totalorder %s133, %s135
      %p142 = scmp.eq.s32.totalorder %s20, 1
      %p143 = por %p141, %p142
      %p144 = scmp.ne.s32.totalorder %s135, %s136
      %p145 = scmp.eq.s32.totalorder %s20, 0
      %p146 = por %p144, %p145
      %p147 = scmp.ne.s32.totalorder %s135, %s136
      %p148 = scmp.eq.s32.totalorder %s21, 1
      %p149 = por %p147, %p148
      %p151 = scmp.ne.s32.totalorder %s136, %s150
      %p152 = scmp.eq.s32.totalorder %s21, 0
      %p153 = por %p151, %p152
      %s154 = ssub.s32 %s15, %s22
      %p155 = scmp.eq.s32.totalorder %s154, 0
      %s157 = sadd.s32 %s156, 1
      %s158 = scalar_select %p155, %s156, %s157
      %p161 = pneg %p155
      %p162 = scmp.eq.s32.totalorder %s15, 1
      %p163 = por %p161, %p162
      %p164 = scmp.ne.s32.totalorder %s156, %s159
      %p165 = scmp.eq.s32.totalorder %s15, 0
      %p166 = por %p164, %p165
      %p167 = scmp.ne.s32.totalorder %s156, %s159
      %p168 = scmp.eq.s32.totalorder %s20, 1
      %p169 = por %p167, %p168
      %p170 = scmp.ne.s32.totalorder %s159, %s160
      %p171 = scmp.eq.s32.totalorder %s20, 0
      %p172 = por %p170, %p171
      %p173 = scmp.ne.s32.totalorder %s159, %s160
      %p174 = scmp.eq.s32.totalorder %s21, 1
      %p175 = por %p173, %p174
      %p177 = scmp.ne.s32.totalorder %s160, %s176
      %p178 = scmp.eq.s32.totalorder %s21, 0
      %p179 = por %p177, %p178
      %p180 = scmp.le.s32.totalorder 1, %s15
      %p181 = scmp.lt.s32.totalorder %s15, 3
      %p182 = pnand %p180, %p181
      %p183 = pneg %p182
      // Predicated region
      $region9: #{tpu_custom_call.1} parent=5 // pred_check
        _
      $region10: #{tpu_custom_call.1} parent=5 // pred_check_branch
        %185 = sbr.rel (%p182) target = $region12
      $region11: #{tpu_custom_call.1} parent=5 // pred_region
        %s186 = ssub.s32 %s15, 1
        // Predicated region
        $region13: #{tpu_custom_call.1} parent=11 // pred_check
          %p187 = pneg %p62
        $region14: #{tpu_custom_call.1} parent=11 // pred_check_branch
          %189 = sbr.rel (%p187) target = $region16
        $region15: #{tpu_custom_call.1} parent=11 // pred_region
          _
        $region16: #{tpu_custom_call.1} parent=11 // pred_fallthru
          _
        // Predicated region
        $region17: #{tpu_custom_call.1} parent=11 // pred_check
          %p190 = pneg %p83
        $region18: #{tpu_custom_call.1} parent=11 // pred_check_branch
          %192 = sbr.rel (%p190) target = $region20
        $region19: #{tpu_custom_call.1} parent=11 // pred_region
          _
        $region20: #{tpu_custom_call.1} parent=11 // pred_fallthru
          _
        // Predicated region
        $region21: #{tpu_custom_call.1} parent=11 // pred_check
          %p193 = pneg %p104
        $region22: #{tpu_custom_call.1} parent=11 // pred_check_branch
          %195 = sbr.rel (%p193) target = $region24
        $region23: #{tpu_custom_call.1} parent=11 // pred_region
          _
        $region24: #{tpu_custom_call.1} parent=11 // pred_fallthru
          _
        // Predicated region
        $region25: #{tpu_custom_call.1} parent=11 // pred_check
          %p196 = pneg %p125
        $region26: #{tpu_custom_call.1} parent=11 // pred_check_branch
          %198 = sbr.rel (%p196) target = $region28
        $region27: #{tpu_custom_call.1} parent=11 // pred_region
          _
        $region28: #{tpu_custom_call.1} parent=11 // pred_fallthru
          _
        // Predicated region
        $region29: #{tpu_custom_call.1} parent=11 // pred_check
          %p199 = pneg %p146
        $region30: #{tpu_custom_call.1} parent=11 // pred_check_branch
          %201 = sbr.rel (%p199) target = $region32
        $region31: #{tpu_custom_call.1} parent=11 // pred_region
          _
        $region32: #{tpu_custom_call.1} parent=11 // pred_fallthru
          _
      $region12: #{tpu_custom_call.1} parent=5 // pred_fallthru
        _
      %p202 = scmp.lt.s32.totalorder %s15, 2
      // Predicated region
      $region33: #{tpu_custom_call.1} parent=5 // pred_check
        %p203 = pneg %p202
      $region34: #{tpu_custom_call.1} parent=5 // pred_check_branch
        %205 = sbr.rel (%p203) target = $region36
      $region35: #{tpu_custom_call.1} parent=5 // pred_region
        // Predicated region
        $region37: #{tpu_custom_call.1} parent=35 // pred_check
          %p206 = pneg %p35
        $region38: #{tpu_custom_call.1} parent=35 // pred_check_branch
          %208 = sbr.rel (%p206) target = $region40
        $region39: #{tpu_custom_call.1} parent=35 // pred_region
          %p209 = scmp.lt.s32.totalorder %s15, 1
          %s210 = scalar_select %p209, %s15, 1
          %s211 = smul.addr %s210, 2
          %s212 = smul.addr %s211, 8
          %s213 = scalar_lea.vmem %s0, %s212
        $region40: #{tpu_custom_call.1} parent=35 // pred_fallthru
          _
      $region36: #{tpu_custom_call.1} parent=5 // pred_fallthru
        _
      %p214 = scmp.le.s32.totalorder 1, %s15
      %p215 = scmp.lt.s32.totalorder %s15, 3
      %p216 = pnand %p214, %p215
      %p217 = pneg %p216
      // Predicated region
      $region41: #{tpu_custom_call.1} parent=5 // pred_check
        _
      $region42: #{tpu_custom_call.1} parent=5 // pred_check_branch
        %219 = sbr.rel (%p216) target = $region44
      $region43: #{tpu_custom_call.1} parent=5 // pred_region
        %s220 = ssub.s32 %s15, 1
        %p221 = scmp.lt.s32.totalorder %s20, 1
        %s222 = scalar_select %p221, %s20, 1
        %s223 = smul.addr %s222, 2
        %s224 = smul.addr %s223, 8
        %s225 = scalar_lea.vmem %s0, %s224
        %p226 = pneg %p41
        %p227 = pneg %p38
        %p228 = pneg %p62
        %p229 = pneg %p59
        %p230 = pneg %p83
        %p231 = pneg %p80
        %p232 = pneg %p104
        %p233 = pneg %p101
        %p234 = pneg %p125
        %p235 = pneg %p122
        %p236 = pneg %p146
        %p237 = pneg %p143
        %p238 = pneg %p172
        %p239 = pneg %p169
        %s240 = sand.u32 %s159, 1
        %s241 = scalar_lea.sflag [#allocation3], %s240
        %s242 = sand.u32 %s159, 1
        %s243 = scalar_lea.vmem [#allocation2], %s242
        %p244 = scmp.lt.s32.totalorder %s20, 1
        %s245 = scalar_select %p244, %s20, 1
        %s246 = smul.addr %s245, 2
        %s247 = smul.addr %s246, 8
        %s248 = scalar_lea.vmem %s0, %s247
        %v250 = vld [vmem:[%s248] sm:$0xff]
        %v251 = vld [vmem:[%s248 + $0x8] sm:$0xff]
        %v252 = vpack.c.bf16 %v251, %v250
        %v253 = vld [vmem:[%s1] sm:$0xf]
        %v254 = vld [vmem:[%s1 + $0x4] sm:$0xf]
        %v257 = vunpack.c.l.b16 %v253
        %v258 = vunpack.c.l.b16 %v254
        %v259 = vpack.c.b16 %v258, %v257
        %vm260 = vcmask 261120
        %v262 = vsel %vm260, %v259, 0
        %v265 = vsel %vm260, %v252, 0
        %267 = vmatprep.subr.bf16.mxu0 0
        %268 = vmatpush1.bf16.xpose.msra.mxu0 0
        %269 = vmatprep.subr.bf16.mxu0 0
        %270 = vmatpush1.bf16.xpose.msra.mxu0 0
        %271 = vmatprep.subr.bf16.mxu0 0
        %272 = vmatpush1.bf16.xpose.msra.mxu0 0
        %273 = vmatprep.subr.bf16.mxu0 0
        %274 = vmatpush1.bf16.xpose.msra.mxu0 0
        %275 = vmatprep.subr.bf16.mxu0 0
        %276 = vmatpush1.bf16.xpose.msra.mxu0 0
        %277 = vmatprep.subr.bf16.mxu0 0
        %278 = vmatpush1.bf16.xpose.msra.mxu0 0
        %279 = vmatprep.subr.bf16.mxu0 0
        %280 = vmatpush1.bf16.xpose.msra.mxu0 0
        %281 = vmatprep.subr.bf16.mxu0 0
        %282 = vmatpush1.bf16.xpose.msra.mxu0 %v265
        %283 = vmatprep.subr.bf16.mxu0 0
        %284 = vmatpush2.bf16.xpose.msra.mxu0 0
        %285 = vmatprep.subr.bf16.mxu0 0
        %286 = vmatpush2.bf16.xpose.msra.mxu0 0
        %287 = vmatprep.subr.bf16.mxu0 0
        %288 = vmatpush2.bf16.xpose.msra.mxu0 0
        %289 = vmatprep.subr.bf16.mxu0 0
        %290 = vmatpush2.bf16.xpose.msra.mxu0 0
        %291 = vmatprep.subr.bf16.mxu0 0
        %292 = vmatpush2.bf16.xpose.msra.mxu0 0
        %293 = vmatprep.subr.bf16.mxu0 0
        %294 = vmatpush2.bf16.xpose.msra.mxu0 0
        %295 = vmatprep.subr.bf16.mxu0 0
        %296 = vmatpush2.bf16.xpose.msra.mxu0 0
        %297 = vmatprep.subr.bf16.mxu0 0
        %298 = vmatpush2.bf16.xpose.msra.mxu0 0
        %299 = vmatprep.mubr.bf16.mxu0 0
        %300 = vmatmul.mubr.bf16.gmra.mxu0 %v262
        %v301 = vpop.f32.mrf.mxu0
        %v302 = vadd.f32 0.0, %v301
        %v303 = vpop.f32.mrf.mxu0
        %v304 = vpop.f32.mrf.mxu0
        %v305 = vadd.f32 0.0, %v304
        %v306 = vpop.f32.mrf.mxu0
        %307 = vdwg.mxu0
        %v308 = vld [vmem:[%s5] sm:$0x1]
        %v309 = vlaneseq
        %v310 = vshrl.u32 %v309, 7
        %v311 = vsub.s32 0, %v310
        %v312 = vrot.slane %v308, %v311
        %v313 = vmul.f32 %v302, %v312
        %v314 = vmul.f32 %v305, %v312
        %v315 = vld [vmem:[%s4] sm:$0xff]
        %v316 = vld [vmem:[%s4 + $0x8] sm:$0xff]
        %v317 = vadd.f32 %v313, %v315
        %v318 = vadd.f32 %v314, %v316
        %v319 = vld [vmem:[%s5 + $0x1] sm:$0x1]
        %v320 = vpack.c.bf16 %v318, %v317
        %v321 = vld [vmem:[%s2] sm:$0xf]
        %v322 = vld [vmem:[%s2 + $0x4] sm:$0xf]
        %v323 = vlaneseq
        %v324 = vshrl.u32 %v323, 7
        %v325 = vsub.s32 0, %v324
        %v326 = vrot.slane %v319, %v325
        %v329 = vunpack.c.l.b16 %v321
        %v330 = vunpack.c.l.b16 %v322
        %v331 = vpack.c.b16 %v330, %v329
        %vm333 = vcmask 130048
        %v335 = vsel %vm333, %v320, 0
        %337 = vmatprep.subr.bf16.mxu0 0
        %338 = vmatpush1.bf16.msra.mxu0 0
        %339 = vmatprep.subr.bf16.mxu0 0
        %340 = vmatpush1.bf16.msra.mxu0 0
        %341 = vmatprep.subr.bf16.mxu0 0
        %342 = vmatpush1.bf16.msra.mxu0 0
        %343 = vmatprep.subr.bf16.mxu0 0
        %344 = vmatpush1.bf16.msra.mxu0 0
        %345 = vmatprep.subr.bf16.mxu0 0
        %346 = vmatpush1.bf16.msra.mxu0 0
        %347 = vmatprep.subr.bf16.mxu0 0
        %348 = vmatpush1.bf16.msra.mxu0 0
        %349 = vmatprep.subr.bf16.mxu0 0
        %350 = vmatpush1.bf16.msra.mxu0 0
        %351 = vmatprep.subr.bf16.mxu0 0
        %352 = vmatpush1.bf16.msra.mxu0 %v331
        %353 = vmatprep.subr.bf16.mxu0 0
        %354 = vmatpush2.bf16.msra.mxu0 0
        %355 = vmatprep.subr.bf16.mxu0 0
        %356 = vmatpush2.bf16.msra.mxu0 0
        %357 = vmatprep.subr.bf16.mxu0 0
        %358 = vmatpush2.bf16.msra.mxu0 0
        %359 = vmatprep.subr.bf16.mxu0 0
        %360 = vmatpush2.bf16.msra.mxu0 0
        %361 = vmatprep.subr.bf16.mxu0 0
        %362 = vmatpush2.bf16.msra.mxu0 0
        %363 = vmatprep.subr.bf16.mxu0 0
        %364 = vmatpush2.bf16.msra.mxu0 0
        %365 = vmatprep.subr.bf16.mxu0 0
        %366 = vmatpush2.bf16.msra.mxu0 0
        %367 = vmatprep.subr.bf16.mxu0 0
        %368 = vmatpush2.bf16.msra.mxu0 0
        %369 = vmatprep.mubr.bf16.mxu0 0
        %370 = vmatmul.mubr.bf16.gmra.mxu0 %v335
        %v371 = vpop.f32.mrf.mxu0
        %v372 = vadd.f32 %v326, %v371
        %v373 = vpop.f32.mrf.mxu0
        %v374 = vpop.f32.mrf.mxu0
        %v375 = vadd.f32 %v326, %v374
        %v376 = vpop.f32.mrf.mxu0
        %377 = vdwg.mxu0
        %v378 = vtanh.pop %v372
        %v379 = vtanh.pop %v375
        %v380 = vpack.c.bf16 %v379, %v378
        %v381 = vld [vmem:[%s3] sm:$0xf]
        %v382 = vld [vmem:[%s3 + $0x4] sm:$0xf]
        %v383 = vld [vmem:[%s3 + $0x8] sm:$0xf]
        %v384 = vld [vmem:[%s3 + $0xc] sm:$0xf]
        %v385 = vld [vmem:[%s3 + $0x10] sm:$0xf]
        %v386 = vld [vmem:[%s3 + $0x14] sm:$0xf]
        %v387 = vld [vmem:[%s3 + $0x18] sm:$0xf]
        %v388 = vld [vmem:[%s3 + $0x1c] sm:$0xf]
        %v389 = vld [vmem:[%s3 + $0x20] sm:$0xf]
        %v390 = vld [vmem:[%s3 + $0x24] sm:$0xf]
        %v391 = vld [vmem:[%s3 + $0x28] sm:$0xf]
        %v392 = vld [vmem:[%s3 + $0x2c] sm:$0xf]
        %v393 = vld [vmem:[%s3 + $0x30] sm:$0xf]
        %v394 = vld [vmem:[%s3 + $0x34] sm:$0xf]
        %v395 = vld [vmem:[%s3 + $0x38] sm:$0xf]
        %v396 = vld [vmem:[%s3 + $0x3c] sm:$0xf]
        %v413 = vunpack.c.l.b16 %v381
        %v414 = vunpack.c.l.b16 %v382
        %v415 = vunpack.c.l.b16 %v383
        %v416 = vunpack.c.l.b16 %v384
        %v417 = vunpack.c.l.b16 %v385
        %v418 = vunpack.c.l.b16 %v386
        %v419 = vunpack.c.l.b16 %v387
        %v420 = vunpack.c.l.b16 %v388
        %v421 = vunpack.c.l.b16 %v389
        %v422 = vunpack.c.l.b16 %v390
        %v423 = vunpack.c.l.b16 %v391
        %v424 = vunpack.c.l.b16 %v392
        %v425 = vunpack.c.l.b16 %v393
        %v426 = vunpack.c.l.b16 %v394
        %v427 = vunpack.c.l.b16 %v395
        %v428 = vunpack.c.l.b16 %v396
        %v429 = vpack.c.b16 %v414, %v413
        %v430 = vpack.c.b16 %v416, %v415
        %v431 = vpack.c.b16 %v418, %v417
        %v432 = vpack.c.b16 %v420, %v419
        %v433 = vpack.c.b16 %v422, %v421
        %v434 = vpack.c.b16 %v424, %v423
        %v435 = vpack.c.b16 %v426, %v425
        %v436 = vpack.c.b16 %v428, %v427
        %445 = vmatprep.subr.bf16.mxu0 0
        %446 = vmatpush1.bf16.msra.mxu0 %v436
        %447 = vmatprep.subr.bf16.mxu0 0
        %448 = vmatpush1.bf16.msra.mxu0 %v435
        %449 = vmatprep.subr.bf16.mxu0 0
        %450 = vmatpush1.bf16.msra.mxu0 %v434
        %451 = vmatprep.subr.bf16.mxu0 0
        %452 = vmatpush1.bf16.msra.mxu0 %v433
        %453 = vmatprep.subr.bf16.mxu0 0
        %454 = vmatpush1.bf16.msra.mxu0 %v432
        %455 = vmatprep.subr.bf16.mxu0 0
        %456 = vmatpush1.bf16.msra.mxu0 %v431
        %457 = vmatprep.subr.bf16.mxu0 0
        %458 = vmatpush1.bf16.msra.mxu0 %v430
        %459 = vmatprep.subr.bf16.mxu0 0
        %460 = vmatpush1.bf16.msra.mxu0 %v429
        %461 = vmatprep.subr.bf16.mxu0 0
        %462 = vmatpush2.bf16.msra.mxu0 0
        %463 = vmatprep.subr.bf16.mxu0 0
        %464 = vmatpush2.bf16.msra.mxu0 0
        %465 = vmatprep.subr.bf16.mxu0 0
        %466 = vmatpush2.bf16.msra.mxu0 0
        %467 = vmatprep.subr.bf16.mxu0 0
        %468 = vmatpush2.bf16.msra.mxu0 0
        %469 = vmatprep.subr.bf16.mxu0 0
        %470 = vmatpush2.bf16.msra.mxu0 0
        %471 = vmatprep.subr.bf16.mxu0 0
        %472 = vmatpush2.bf16.msra.mxu0 0
        %473 = vmatprep.subr.bf16.mxu0 0
        %474 = vmatpush2.bf16.msra.mxu0 0
        %475 = vmatprep.subr.bf16.mxu0 0
        %476 = vmatpush2.bf16.msra.mxu0 0
        %477 = vmatprep.mubr.bf16.mxu0 0
        %478 = vmatmul.mubr.bf16.gmra.mxu0 %v380
        %v479 = vpop.f32.mrf.mxu0
        %v480 = vadd.f32 0.0, %v479
        %v481 = vpop.f32.mrf.mxu0
        %v482 = vpop.f32.mrf.mxu0
        %v483 = vadd.f32 0.0, %v482
        %v484 = vpop.f32.mrf.mxu0
        %485 = vdwg.mxu0
        %v486 = vsel %vm333, %v480, -inf
        %v487 = vsel %vm333, %v483, -inf
        %v488 = vmax.f32 %v486, %v487
        %v489 = vrot.slane %v488, 4
        %v490 = vmax.f32 %v488, %v489
        %v491 = vrot.slane %v490, 2
        %v492 = vmax.f32 %v490, %v491
        %v493 = vrot.slane %v492, 1
        %v494 = vmax.f32 %v492, %v493
        %v495 = vsub.f32 %v480, %v494
        %v496 = vsub.f32 %v483, %v494
        %v497 = vmul.f32 %v495, 1.442695
        %v498 = vpow.pop %v497
        %v499 = vmul.f32 %v496, 1.442695
        %v500 = vpow.pop %v499
        %v501 = vsel %vm333, %v498, 0.0
        %v502 = vsel %vm333, %v500, 0.0
        %v503 = vadd.f32 %v501, %v502
        %v504 = vrot.slane %v503, 4
        %v505 = vadd.f32 %v503, %v504
        %v506 = vrot.slane %v505, 2
        %v507 = vadd.f32 %v505, %v506
        %v508 = vrot.slane %v507, 1
        %v509 = vadd.f32 %v507, %v508
        %v510 = vrcp.pop %v509
        %v511 = vmul.f32 %v498, %v510
        %v512 = vmul.f32 %v500, %v510
        %v513 = vmul.f32 %v511, %v317
        %v514 = vmul.f32 %v512, %v318
        %v515 = vsel %vm333, %v513, 0.0
        %v516 = vsel %vm333, %v514, 0.0
        %v517 = vadd.f32 %v515, %v516
        %v518 = vrot.slane %v517, 4
        %v519 = vadd.f32 %v517, %v518
        %v520 = vrot.slane %v519, 2
        %v521 = vadd.f32 %v519, %v520
        %v522 = vrot.slane %v521, 1
        %v523 = vadd.f32 %v521, %v522
        %v524 = vmul.f32 %v513, %v317
        %v525 = vmul.f32 %v514, %v318
        %v526 = vsel %vm333, %v524, 0.0
        %v527 = vsel %vm333, %v525, 0.0
        %v528 = vadd.f32 %v526, %v527
        %v529 = vrot.slane %v528, 4
        %v530 = vadd.f32 %v528, %v529
        %v531 = vrot.slane %v530, 2
        %v532 = vadd.f32 %v530, %v531
        %v533 = vrot.slane %v532, 1
        %v534 = vadd.f32 %v532, %v533
        %v535 = vmul.f32 %v523, %v523
        %v536 = vsub.f32 %v534, %v535
        %v537 = vmax.f32 %v536, 1e-06
        %v538 = vrsqrt.pop %v537
        %v539 = vmul.f32 %v537, %v538
        %vm540 = vcmp.eq.f32.partialorder %v537, inf
        %v541 = vsel %vm540, %v537, %v539
        %vm542 = vcmp.eq.f32.partialorder %v537, 0.0
        %v543 = vand.u32 %v537, 2147483648
        %v544 = vsel %vm542, %v543, %v541
        %v545 = vld [vmem:[%s5 + $0x2] sm:$0x1]
        %v546 = vmul.f32 %v523, %v545
        %v547 = vld [vmem:[%s5 + $0x3] sm:$0x1]
        %v548 = vadd.f32 %v546, %v547
        %vm549 = vcmask 122880
        %550 = vst.msk [vmem:[%s243] sm:$0x1] %vm549, %v548
        %v551 = vld [vmem:[%s5 + $0x4] sm:$0x1]
        %v552 = vmul.f32 %v544, %v551
        %v553 = vld [vmem:[%s5 + $0x5] sm:$0x1]
        %v554 = vadd.f32 %v552, %v553
        %556 = vrot.lane.b32.xlu0 %v554, 16
        %v557 = vpop.permute.xlu0 %556
        %vm559 = vcmask 254080
        %560 = vst.msk [vmem:[%s243] sm:$0x1] %vm559, %v557
        %s561 = sand.u32 %s159, 1
        %s562 = scalar_lea.sflag [#allocation3], %s561
        %s563 = sand.u32 %s159, 1
        %s564 = scalar_lea.vmem [#allocation2], %s563
        // Predicated region
        $region45: #{tpu_custom_call.1} parent=43 // pred_check
          %p565 = pneg %p169
        $region46: #{tpu_custom_call.1} parent=43 // pred_check_branch
          %567 = sbr.rel (%p565) target = $region48
        $region47: #{tpu_custom_call.1} parent=43 // pred_region
          %s569 = ssub.s32 16, 16
          %570 = vsyncadd %s562, %s569
          %s571 = smul.addr %s20, 16
          %s572 = scalar_lea.hbm %s6, %s571
          %s574 = sshll.u32 %s564, 4
          %s575 = int_to_ptr.vmem [resolvable:$true] %s574
          %577 = dma.vmem_to_hbm [thread:$0]  %s575, 16, %s572, %s562
        $region48: #{tpu_custom_call.1} parent=43 // pred_fallthru
          _
      $region44: #{tpu_custom_call.1} parent=5 // pred_fallthru
        _
      %p578 = scmp.le.s32.totalorder 2, %s15
      // Predicated region
      $region49: #{tpu_custom_call.1} parent=5 // pred_check
        %p579 = pneg %p578
      $region50: #{tpu_custom_call.1} parent=5 // pred_check_branch
        %581 = sbr.rel (%p579) target = $region52
      $region51: #{tpu_custom_call.1} parent=5 // pred_region
        %s582 = ssub.s32 %s15, 2
        // Predicated region
        $region53: #{tpu_custom_call.1} parent=51 // pred_check
          %p583 = pneg %p175
        $region54: #{tpu_custom_call.1} parent=51 // pred_check_branch
          %585 = sbr.rel (%p583) target = $region56
        $region55: #{tpu_custom_call.1} parent=51 // pred_region
          %s586 = sand.u32 %s160, 1
          %s587 = scalar_lea.sflag [#allocation3], %s586
          %s588 = sand.u32 %s160, 1
          %s589 = scalar_lea.vmem [#allocation2], %s588
          %590 = dma.done %s587, 16
        $region56: #{tpu_custom_call.1} parent=51 // pred_fallthru
          _
      $region52: #{tpu_custom_call.1} parent=5 // pred_fallthru
        _
    $region6: #{tpu_custom_call.1} parent=1 // loop_footer
      %s19 = sadd.s32 1, %s15
    $region7: #{tpu_custom_call.1} parent=1 // loop_footer_branch
      %14 = sbr.rel target = $region3
    $region8: #{tpu_custom_call.1} parent=1 // loop_exit
      _
    %591 = vsyncpa [#allocation3], 1
    %s592 = scalar_lea.sflag [#allocation3], 1
    %593 = vsyncpa %s592, 1

</llo_original>
